<compile_context>
chip_gen: v6e
topology: v6e:2x2x1
jax: 0.10.0
libtpu: 0.0.40
codegen_flags: <defaults>
</compile_context>

<pallas_src>
import jax
import jax.numpy as jnp
import numpy as np
from jax.experimental import pallas as pl
from jax.experimental.pallas import tpu as pltpu


def _xstats_kernel(xp_ref, stats_ref):
    """Per-sample input statistics for the shortcut BatchNorm.

    Emits [X @ X^T | sum(X)] of shape (cin, cin+1).  The zero halo columns of
    the padded input contribute nothing to either sum, so the padded sample is
    used directly (no slicing / extra copy).
    """
    xb = xp_ref[0]                                                    # (cin, Lp)
    s = jnp.sum(xb, axis=1, keepdims=True)                            # (cin, 1)
    cov = jnp.dot(xb, xb.T, preferred_element_type=jnp.float32)       # (cin, cin)
    stats_ref[0] = jnp.concatenate([cov, s], axis=1)                  # (cin, cin+1)


def _rescnn_fused_kernel(xp_ref, w1_ref, w2_ref, w3_ref, wss_ref, shift_ref,
                         o_ref):
    """One batch sample per grid step (NCL layout, L on lanes).

    out = relu( conv3(conv2(conv1(x))) + (BN_scale*Ws) @ x + BN_shift )
    The BN scale is already folded into wss_ref; shift_ref is (nf, 1).
    """
    cin = xp_ref.shape[1]
    nf, L = o_ref.shape[1], o_ref.shape[2]
    ks1 = w1_ref.shape[1] // cin
    ks2 = w2_ref.shape[1] // nf
    ks3 = w3_ref.shape[1] // nf
    pad1 = (ks1 - 1) // 2          # 3
    pad2 = (ks2 - 1) // 2          # 2
    pad3 = (ks3 - 1) // 2          # 1

    xb = xp_ref[0]                 # (cin, L + ks1 - 1); halos already zero

    # conv1 (ks=7): single im2col matmul, K = ks1*cin
    p1 = jnp.concatenate([xb[:, k:k + L] for k in range(ks1)], axis=0)
    h1 = jnp.dot(w1_ref[...], p1, preferred_element_type=jnp.float32)   # (nf, L)

    # conv2 (ks=5): zero-pad h1 once (tiny copy), then one im2col matmul
    z2 = jnp.zeros((nf, pad2), jnp.float32)
    h1p = jnp.concatenate([z2, h1, z2], axis=1)                          # (nf, L+4)
    p2 = jnp.concatenate([h1p[:, k:k + L] for k in range(ks2)], axis=0)
    h2 = jnp.dot(w2_ref[...], p2, preferred_element_type=jnp.float32)

    # conv3 (ks=3)
    z3 = jnp.zeros((nf, pad3), jnp.float32)
    h2p = jnp.concatenate([z3, h2, z3], axis=1)                          # (nf, L+2)
    p3 = jnp.concatenate([h2p[:, k:k + L] for k in range(ks3)], axis=0)
    h3 = jnp.dot(w3_ref[...], p3, preferred_element_type=jnp.float32)

    # shortcut 1x1 conv (BN scale pre-folded into the weights) on the interior
    sc = jnp.dot(wss_ref[...], xb[:, pad1:pad1 + L],
                 preferred_element_type=jnp.float32)                     # (nf, L)

    y = h3 + sc + shift_ref[...]
    o_ref[0] = jnp.maximum(y, 0.0).astype(o_ref.dtype)


def rescnn_block(x_ncl, w1, w2, w3, ws, gamma, beta):
    """x_ncl: (N, Cin, L); conv weights in PyTorch layout (Cout, Cin, ks)."""
    N, cin, L = x_ncl.shape
    nf, _, ks1 = w1.shape
    ks2, ks3 = w2.shape[2], w3.shape[2]
    Lp = L + ks1 - 1
    f32 = jnp.float32

    # Layout glue (tiny, done once): pad L for conv1, flatten conv weights to
    # (Cout, ks*Cin) matching the kernel's im2col row ordering (k-major).
    xpad = jnp.pad(x_ncl.astype(f32),
                   ((0, 0), (0, 0), ((ks1 - 1) // 2, ks1 // 2)))          # (N,cin,Lp)
    w1f = jnp.transpose(w1, (0, 2, 1)).reshape(nf, ks1 * cin).astype(f32)
    w2f = jnp.transpose(w2, (0, 2, 1)).reshape(nf, ks2 * nf).astype(f32)
    w3f = jnp.transpose(w3, (0, 2, 1)).reshape(nf, ks3 * nf).astype(f32)
    wsf = ws[:, :, 0].astype(f32)                                         # (nf, cin)

    def per_n(c, l):
        return pl.BlockSpec((1, c, l), lambda n: (n, 0, 0))

    def full2(r, c):
        return pl.BlockSpec((r, c), lambda n: (0, 0))

    parallel = pltpu.CompilerParams(dimension_semantics=("parallel",))

    # Pass 0: tiny per-sample input statistics (for train-mode BatchNorm).
    stats = pl.pallas_call(
        _xstats_kernel,
        grid=(N,),
        in_specs=[per_n(cin, Lp)],
        out_specs=per_n(cin, cin + 1),
        out_shape=jax.ShapeDtypeStruct((N, cin, cin + 1), f32),
        compiler_params=parallel,
    )(xpad)

    # BatchNorm1d (training mode): global stats of sc = Ws @ x over (N, L),
    # biased variance, eps=1e-5.  Derived from input sums / covariance:
    #   mean_c  = Ws[c,:] @ sum(x) / (N*L)
    #   E[sc^2] = Ws[c,:] @ Cov(x) @ Ws[c,:]^T / (N*L)
    total = jnp.asarray(N * L, f32)
    cov = jnp.sum(stats[:, :, :cin], axis=0)                 # (cin, cin)
    xsum = jnp.sum(stats[:, :, cin], axis=0)                 # (cin,)
    mean_sc = (wsf @ xsum) / total                           # (nf,)
    e2 = jnp.einsum('ci,ij,cj->c', wsf, cov, wsf) / total    # (nf,)
    var_sc = e2 - mean_sc * mean_sc
    inv_std = jax.lax.rsqrt(var_sc + 1e-5)
    g = gamma.astype(f32)
    scale = g * inv_std                                      # (nf,)
    shift = (beta.astype(f32) - mean_sc * scale).reshape(nf, 1)
    wss = wsf * scale[:, None]          # fold BN scale into the 1x1 conv weights

    # Pass 1: fully fused conv stack + shortcut + BN-apply + add + ReLU.
    out = pl.pallas_call(
        _rescnn_fused_kernel,
        grid=(N,),
        in_specs=[per_n(cin, Lp), full2(nf, ks1 * cin), full2(nf, ks2 * nf),
                  full2(nf, ks3 * nf), full2(nf, cin), full2(nf, 1)],
        out_specs=per_n(nf, L),
        out_shape=jax.ShapeDtypeStruct((N, nf, L), f32),
        compiler_params=parallel,
    )(xpad, w1f, w2f, w3f, wss, shift)
    return out                                                            # (N, nf, L)


def _reference_forward(x, w1, w2, w3, ws, gamma, beta):
    """Pure-JAX reference in PyTorch NCL layout (for correctness check)."""
    def conv(h, w, p_l, p_r):
        hp = jnp.pad(h, ((0, 0), (0, 0), (p_l, p_r)))
        return jax.lax.conv_general_dilated(
            hp, w, (1,), 'VALID', dimension_numbers=('NCH', 'OIH', 'NCH'))
    h = conv(x, w1, 3, 3)
    h = conv(h, w2, 2, 2)
    h = conv(h, w3, 1, 1)
    sc = conv(x, ws, 0, 0)
    mean = sc.mean(axis=(0, 2), keepdims=True)
    var = ((sc - mean) ** 2).mean(axis=(0, 2), keepdims=True)
    sc = (sc - mean) / jnp.sqrt(var + 1e-5) * gamma.reshape(1, -1, 1) + beta.reshape(1, -1, 1)
    return jax.nn.relu(h + sc)


if __name__ == "__main__":
    # small shapes consistent with the module: batch=2, ni=4, length=16, nf=8
    N, Cin, L, nf = 2, 4, 16, 8
    key = jax.random.PRNGKey(0)
    k_x, k_w1, k_w2, k_w3, k_ws = jax.random.split(key, 5)

    x = jax.random.normal(k_x, (N, Cin, L), dtype=jnp.float32)
    # deterministic synthetic weights (PyTorch Conv1d layout: (out, in, ks))
    w1 = jax.random.normal(k_w1, (nf, Cin, 7), dtype=jnp.float32) * 0.2
    w2 = jax.random.normal(k_w2, (nf, nf, 5), dtype=jnp.float32) * 0.2
    w3 = jax.random.normal(k_w3, (nf, nf, 3), dtype=jnp.float32) * 0.2
    ws = jax.random.normal(k_ws, (nf, Cin, 1), dtype=jnp.float32) * 0.2
    gamma = jnp.ones((nf,), jnp.float32)   # fresh BatchNorm1d: weight=1
    beta = jnp.zeros((nf,), jnp.float32)   # fresh BatchNorm1d: bias=0

    out = rescnn_block(x, w1, w2, w3, ws, gamma, beta)
    out = jax.block_until_ready(out)

    ref = _reference_forward(x, w1, w2, w3, ws, gamma, beta)
    np.testing.assert_allclose(np.asarray(out), np.asarray(ref), rtol=1e-4, atol=1e-4)

    print("KERNEL_OK")
</pallas_src>

<mosaic_0001>
module attributes {stable_mosaic.version = 11 : i64} {
  func.func @_xstats_kernel(%arg0: i32, %arg1: memref<1x4x22xf32, #tpu.memory_space<vmem>>, %arg2: memref<1x4x5xf32, #tpu.memory_space<vmem>>) attributes {dimension_semantics = [#tpu.dimension_semantics<parallel>], iteration_bounds = array<i64: 2>, scalar_prefetch = 0 : i64, scratch_operands = 0 : i64, tpu.core_type = #tpu.core_type<tc>, window_params = [{transform_indices = @transform_0, window_bounds = array<i64: 1, 4, 22>}, {transform_indices = @transform_1, window_bounds = array<i64: 1, 4, 5>}]} {
    %c0 = arith.constant 0 : index
    %c0_0 = arith.constant 0 : index
    %c0_1 = arith.constant 0 : index
    %0 = vector.load %arg1[%c0, %c0_0, %c0_1] : memref<1x4x22xf32, #tpu.memory_space<vmem>>, vector<1x4x22xf32>
    %1 = vector.shape_cast %0 : vector<1x4x22xf32> to vector<4x22xf32>
    %cst = arith.constant dense<0.000000e+00> : vector<4xf32>
    %2 = vector.multi_reduction <add>, %1, %cst [1] : vector<4x22xf32> to vector<4xf32>
    %3 = vector.shape_cast %2 : vector<4xf32> to vector<4x1xf32>
    %4 = tpu.transpose %1, [1, 0] : vector<4x22xf32> -> vector<22x4xf32>
    %cst_2 = arith.constant dense<0.000000e+00> : vector<4x4xf32>
    %5 = tpu.matmul %1, %4, %cst_2 {dimension_numbers = #tpu.dot_dimension_numbers<[1], [0], [0], [1], [0, 0, 1, 1], [], []>} : vector<4x22xf32>, vector<22x4xf32>, vector<4x4xf32> -> vector<4x4xf32>
    %6 = tpu.concatenate %5, %3 in 1 : vector<4x4xf32>, vector<4x1xf32> -> vector<4x5xf32>
    %c0_3 = arith.constant 0 : index
    %c0_4 = arith.constant 0 : index
    %c0_5 = arith.constant 0 : index
    %7 = vector.load %arg2[%c0_3, %c0_4, %c0_5] : memref<1x4x5xf32, #tpu.memory_space<vmem>>, vector<1x4x5xf32>
    %8 = vector.shape_cast %7 : vector<1x4x5xf32> to vector<4x5xf32>
    %9 = vector.shape_cast %6 : vector<4x5xf32> to vector<1x4x5xf32>
    tpu.vector_store %arg2[%c0_3, %c0_4, %c0_5], %9 {strides = array<i32>} : memref<1x4x5xf32, #tpu.memory_space<vmem>>, vector<1x4x5xf32>,
    return
  }
  func.func @transform_0(%arg0: i32) -> (i32, i32, i32) {
    %c0_i32 = arith.constant 0 : i32
    %c0_i32_0 = arith.constant 0 : i32
    %c0_i32_1 = arith.constant 0 : i32
    return %arg0, %c0_i32, %c0_i32_0 : i32, i32, i32
  }
  func.func @transform_1(%arg0: i32) -> (i32, i32, i32) {
    %c0_i32 = arith.constant 0 : i32
    %c0_i32_0 = arith.constant 0 : i32
    %c0_i32_1 = arith.constant 0 : i32
    return %arg0, %c0_i32, %c0_i32_0 : i32, i32, i32
  }
}

</mosaic_0001>

<llo_original>
// kernel: tpu_custom_call.1
$region0: #{tpu_custom_call.1}
  #allocation0 [shape = 'u32[]', space=smem, size = 0x4, offset = 0x4, fixed_abs, tag = 'smem constant byte address 0x4 - core index']
  #allocation1 [shape = 'u32[144,128]{1,0:T(1,128)}', space=vmem, size = 0x12000, scoped, tag = 'internal scratch']
  %s0 = inlined_call_operand.hbm [shape: f32[2,4,22], index: 0, kind: input, shape index: {}]
  %s1 = inlined_call_operand.hbm [shape: f32[2,4,5], index: 1, kind: output, shape index: {}]
  %s2 = sld [smem:[#allocation0]]
  $region41: #{tpu_custom_call.1} parent=0
    _
  %s4 = ssub.s32 1, %s2
  %s5 = scalar_select 0, %s4, %s2
  $region1: #{tpu_custom_call.1} parent=0
    #allocation2 [shape = 'u8[4096]{0}', space=vmem, size = 0x1000, scoped, tag = 'input window, operand 0']
    #allocation3 [shape = 's32[2]{0}', space=sflag, size = 0x8, scoped, tag = 'scoped memory for tpu_custom_call.1']
    #allocation4 [shape = 's32[2]{0}', space=sflag, size = 0x8, scoped, tag = 'scoped memory for tpu_custom_call.1']
    #allocation5 [shape = 'u8[4096]{0}', space=vmem, size = 0x1000, scoped, tag = 'output window, operand 0']
    %6 = vsyncpa [#allocation3], 0
    %s7 = scalar_lea.sflag [#allocation3], 1
    %8 = vsyncpa %s7, 0
    %9 = vsyncpa [#allocation4], 0
    %s10 = scalar_lea.sflag [#allocation4], 1
    %11 = vsyncpa %s10, 0
    loop: start=0, step=1, limit=4
    $region2: #{tpu_custom_call.1} parent=1 // loop_pre_header
      _
    $region3: #{tpu_custom_call.1} parent=1 // loop_header
      %s13 = sphi 0, %s17
      %p14 = scmp.ge.s32.totalorder %s13, 4
      %s23 = sphi 0, %s25
      %s26 = sphi 0, %s23
      %s27 = sphi 0, %s26
      %s43 = sphi 0, %s27
      %s49 = sphi 0, %s51
      %s52 = sphi 0, %s49
      %s53 = sphi 0, %s52
      %s69 = sphi 0, %s53
    $region4: #{tpu_custom_call.1} parent=1 // loop_header_branch
      %16 = sbr.rel (%p14) target = $region8
    $region5: #{tpu_custom_call.1} parent=1 // loop_body
      %s18 = ssub.s32 %s13, 1
      %s19 = ssub.s32 %s13, 2
      %s20 = sadd.s32 %s13, 1
      %s21 = ssub.s32 %s13, %s20
      %p22 = scmp.eq.s32.totalorder %s21, 0
      %s24 = sadd.s32 %s23, 1
      %s25 = scalar_select %p22, %s23, %s24
      %p28 = pneg %p22
      %p29 = scmp.eq.s32.totalorder %s13, 1
      %p30 = por %p28, %p29
      %p31 = scmp.ne.s32.totalorder %s23, %s26
      %p32 = scmp.eq.s32.totalorder %s13, 0
      %p33 = por %p31, %p32
      %p34 = scmp.ne.s32.totalorder %s23, %s26
      %p35 = scmp.eq.s32.totalorder %s18, 1
      %p36 = por %p34, %p35
      %p37 = scmp.ne.s32.totalorder %s26, %s27
      %p38 = scmp.eq.s32.totalorder %s18, 0
      %p39 = por %p37, %p38
      %p40 = scmp.ne.s32.totalorder %s26, %s27
      %p41 = scmp.eq.s32.totalorder %s19, 1
      %p42 = por %p40, %p41
      %p44 = scmp.ne.s32.totalorder %s27, %s43
      %p45 = scmp.eq.s32.totalorder %s19, 0
      %p46 = por %p44, %p45
      %s47 = ssub.s32 %s13, %s20
      %p48 = scmp.eq.s32.totalorder %s47, 0
      %s50 = sadd.s32 %s49, 1
      %s51 = scalar_select %p48, %s49, %s50
      %p54 = pneg %p48
      %p55 = scmp.eq.s32.totalorder %s13, 1
      %p56 = por %p54, %p55
      %p57 = scmp.ne.s32.totalorder %s49, %s52
      %p58 = scmp.eq.s32.totalorder %s13, 0
      %p59 = por %p57, %p58
      %p60 = scmp.ne.s32.totalorder %s49, %s52
      %p61 = scmp.eq.s32.totalorder %s18, 1
      %p62 = por %p60, %p61
      %p63 = scmp.ne.s32.totalorder %s52, %s53
      %p64 = scmp.eq.s32.totalorder %s18, 0
      %p65 = por %p63, %p64
      %p66 = scmp.ne.s32.totalorder %s52, %s53
      %p67 = scmp.eq.s32.totalorder %s19, 1
      %p68 = por %p66, %p67
      %p70 = scmp.ne.s32.totalorder %s53, %s69
      %p71 = scmp.eq.s32.totalorder %s19, 0
      %p72 = por %p70, %p71
      %p73 = scmp.le.s32.totalorder 1, %s13
      %p74 = scmp.lt.s32.totalorder %s13, 3
      %p75 = pnand %p73, %p74
      %p76 = pneg %p75
      // Predicated region
      $region9: #{tpu_custom_call.1} parent=5 // pred_check
        _
      $region10: #{tpu_custom_call.1} parent=5 // pred_check_branch
        %78 = sbr.rel (%p75) target = $region12
      $region11: #{tpu_custom_call.1} parent=5 // pred_region
        %s79 = ssub.s32 %s13, 1
      $region12: #{tpu_custom_call.1} parent=5 // pred_fallthru
        _
      %p80 = scmp.lt.s32.totalorder %s13, 2
      // Predicated region
      $region13: #{tpu_custom_call.1} parent=5 // pred_check
        %p81 = pneg %p80
      $region14: #{tpu_custom_call.1} parent=5 // pred_check_branch
        %83 = sbr.rel (%p81) target = $region16
      $region15: #{tpu_custom_call.1} parent=5 // pred_region
        // Predicated region
        $region17: #{tpu_custom_call.1} parent=15 // pred_check
          %p84 = pneg %p33
        $region18: #{tpu_custom_call.1} parent=15 // pred_check_branch
          %86 = sbr.rel (%p84) target = $region20
        $region19: #{tpu_custom_call.1} parent=15 // pred_region
          %s87 = sand.u32 %s23, 1
          %s88 = scalar_lea.sflag [#allocation3], %s87
          %s89 = sand.u32 %s23, 1
          %s90 = smul.addr %s89, 4
          %s91 = scalar_lea.vmem [#allocation2], %s90
          %s93 = ssub.s32 64, 64
          %94 = vsyncadd %s88, %s93
          %s95 = smul.addr %s13, 64
          %s96 = scalar_lea.hbm %s0, %s95
          %s98 = sshll.u32 %s91, 4
          %s99 = int_to_ptr.vmem [resolvable:$true] %s98
          %101 = dma.hbm_to_vmem [thread:$0]  %s96, 64, %s99, %s88
        $region20: #{tpu_custom_call.1} parent=15 // pred_fallthru
          _
      $region16: #{tpu_custom_call.1} parent=5 // pred_fallthru
        _
      %p102 = scmp.le.s32.totalorder 1, %s13
      %p103 = scmp.lt.s32.totalorder %s13, 3
      %p104 = pnand %p102, %p103
      %p105 = pneg %p104
      // Predicated region
      $region21: #{tpu_custom_call.1} parent=5 // pred_check
        _
      $region22: #{tpu_custom_call.1} parent=5 // pred_check_branch
        %107 = sbr.rel (%p104) target = $region24
      $region23: #{tpu_custom_call.1} parent=5 // pred_region
        %s108 = ssub.s32 %s13, 1
        %s109 = sand.u32 %s26, 1
        %s110 = scalar_lea.sflag [#allocation3], %s109
        %s111 = sand.u32 %s26, 1
        %s112 = smul.addr %s111, 4
        %s113 = scalar_lea.vmem [#allocation2], %s112
        // Predicated region
        $region25: #{tpu_custom_call.1} parent=23 // pred_check
          %p114 = pneg %p39
        $region26: #{tpu_custom_call.1} parent=23 // pred_check_branch
          %116 = sbr.rel (%p114) target = $region28
        $region27: #{tpu_custom_call.1} parent=23 // pred_region
          %117 = dma.done %s110, 64
        $region28: #{tpu_custom_call.1} parent=23 // pred_fallthru
          _
        %s118 = sand.u32 %s26, 1
        %s119 = scalar_lea.sflag [#allocation3], %s118
        %s120 = sand.u32 %s26, 1
        %s121 = smul.addr %s120, 4
        %s122 = scalar_lea.vmem [#allocation2], %s121
        %p123 = pneg %p39
        %p124 = pneg %p36
        %p125 = pneg %p65
        %p126 = pneg %p62
        %s127 = sand.u32 %s52, 1
        %s128 = scalar_lea.sflag [#allocation4], %s127
        %s129 = sand.u32 %s52, 1
        %s130 = smul.addr %s129, 4
        %s131 = scalar_lea.vmem [#allocation5], %s130
        %v132 = vld [vmem:[%s113] sm:$0xf]
        %vm133 = vcmask 175104
        %v134 = vsel %vm133, %v132, 0.0
        %135 = vadd.xlane.f32.xlu0 %v134
        %v136 = vpop.xlane.xlu0 %135
        %vm137 = vcmask 179200
        %v139 = vsel %vm137, %v132, 0
        %141 = vmatprep.subr.mxu0 0.0
        %142 = vmatpush1.xpose.msra.mxu0 0.0
        %143 = vmatprep.subr.mxu0 0.0
        %144 = vmatpush1.xpose.msra.mxu0 0.0
        %145 = vmatprep.subr.mxu0 0.0
        %146 = vmatpush1.xpose.msra.mxu0 0.0
        %147 = vmatprep.subr.mxu0 0.0
        %148 = vmatpush1.xpose.msra.mxu0 0.0
        %149 = vmatprep.subr.mxu0 0.0
        %150 = vmatpush1.xpose.msra.mxu0 0.0
        %151 = vmatprep.subr.mxu0 0.0
        %152 = vmatpush1.xpose.msra.mxu0 0.0
        %153 = vmatprep.subr.mxu0 0.0
        %154 = vmatpush1.xpose.msra.mxu0 0.0
        %155 = vmatprep.subr.mxu0 0.0
        %156 = vmatpush1.xpose.msra.mxu0 0.0
        %157 = vmatprep.subr.mxu0 0.0
        %158 = vmatpush1.xpose.msra.mxu0 0.0
        %159 = vmatprep.subr.mxu0 0.0
        %160 = vmatpush1.xpose.msra.mxu0 0.0
        %161 = vmatprep.subr.mxu0 0.0
        %162 = vmatpush1.xpose.msra.mxu0 0.0
        %163 = vmatprep.subr.mxu0 0.0
        %164 = vmatpush1.xpose.msra.mxu0 0.0
        %165 = vmatprep.subr.mxu0 0.0
        %166 = vmatpush1.xpose.msra.mxu0 0.0
        %167 = vmatprep.subr.mxu0 0.0
        %168 = vmatpush1.xpose.msra.mxu0 0.0
        %169 = vmatprep.subr.mxu0 0.0
        %170 = vmatpush1.xpose.msra.mxu0 0.0
        %171 = vmatprep.subr.mxu0 0.0
        %172 = vmatpush1.xpose.msra.mxu0 %v139
        %173 = vmatprep.subr.mxu0 0.0
        %174 = vmatpush2.xpose.msra.mxu0 0.0
        %175 = vmatprep.subr.mxu0 0.0
        %176 = vmatpush2.xpose.msra.mxu0 0.0
        %177 = vmatprep.subr.mxu0 0.0
        %178 = vmatpush2.xpose.msra.mxu0 0.0
        %179 = vmatprep.subr.mxu0 0.0
        %180 = vmatpush2.xpose.msra.mxu0 0.0
        %181 = vmatprep.subr.mxu0 0.0
        %182 = vmatpush2.xpose.msra.mxu0 0.0
        %183 = vmatprep.subr.mxu0 0.0
        %184 = vmatpush2.xpose.msra.mxu0 0.0
        %185 = vmatprep.subr.mxu0 0.0
        %186 = vmatpush2.xpose.msra.mxu0 0.0
        %187 = vmatprep.subr.mxu0 0.0
        %188 = vmatpush2.xpose.msra.mxu0 0.0
        %189 = vmatprep.subr.mxu0 0.0
        %190 = vmatpush2.xpose.msra.mxu0 0.0
        %191 = vmatprep.subr.mxu0 0.0
        %192 = vmatpush2.xpose.msra.mxu0 0.0
        %193 = vmatprep.subr.mxu0 0.0
        %194 = vmatpush2.xpose.msra.mxu0 0.0
        %195 = vmatprep.subr.mxu0 0.0
        %196 = vmatpush2.xpose.msra.mxu0 0.0
        %197 = vmatprep.subr.mxu0 0.0
        %198 = vmatpush2.xpose.msra.mxu0 0.0
        %199 = vmatprep.subr.mxu0 0.0
        %200 = vmatpush2.xpose.msra.mxu0 0.0
        %201 = vmatprep.subr.mxu0 0.0
        %202 = vmatpush2.xpose.msra.mxu0 0.0
        %203 = vmatprep.subr.mxu0 0.0
        %204 = vmatpush2.xpose.msra.mxu0 0.0
        %205 = vmatprep.mubr.f32.mxu0 0.0
        %206 = vmatmul.mubr.f32.gmra.mxu0 %v139
        %v207 = vpop.f32.mrf.mxu0
        %v208 = vadd.f32 0.0, %v207
        %v209 = vpop.f32.mrf.mxu0
        %210 = vdwg.mxu0
        %vm211 = vcmask 31744
        %v212 = vsel %vm211, %v208, %v136
        %vm213 = vcmask 35840
        %214 = vst.msk [vmem:[%s131] sm:$0xf] %vm213, %v212
        %s215 = sand.u32 %s52, 1
        %s216 = scalar_lea.sflag [#allocation4], %s215
        %s217 = sand.u32 %s52, 1
        %s218 = smul.addr %s217, 4
        %s219 = scalar_lea.vmem [#allocation5], %s218
        // Predicated region
        $region29: #{tpu_custom_call.1} parent=23 // pred_check
          %p220 = pneg %p62
        $region30: #{tpu_custom_call.1} parent=23 // pred_check_branch
          %222 = sbr.rel (%p220) target = $region32
        $region31: #{tpu_custom_call.1} parent=23 // pred_region
          %s224 = ssub.s32 64, 64
          %225 = vsyncadd %s216, %s224
          %s226 = smul.addr %s18, 64
          %s227 = scalar_lea.hbm %s1, %s226
          %s229 = sshll.u32 %s219, 4
          %s230 = int_to_ptr.vmem [resolvable:$true] %s229
          %232 = dma.vmem_to_hbm [thread:$0]  %s230, 64, %s227, %s216
        $region32: #{tpu_custom_call.1} parent=23 // pred_fallthru
          _
      $region24: #{tpu_custom_call.1} parent=5 // pred_fallthru
        _
      %p233 = scmp.le.s32.totalorder 2, %s13
      // Predicated region
      $region33: #{tpu_custom_call.1} parent=5 // pred_check
        %p234 = pneg %p233
      $region34: #{tpu_custom_call.1} parent=5 // pred_check_branch
        %236 = sbr.rel (%p234) target = $region36
      $region35: #{tpu_custom_call.1} parent=5 // pred_region
        %s237 = ssub.s32 %s13, 2
        // Predicated region
        $region37: #{tpu_custom_call.1} parent=35 // pred_check
          %p238 = pneg %p68
        $region38: #{tpu_custom_call.1} parent=35 // pred_check_branch
          %240 = sbr.rel (%p238) target = $region40
        $region39: #{tpu_custom_call.1} parent=35 // pred_region
          %s241 = sand.u32 %s53, 1
          %s242 = scalar_lea.sflag [#allocation4], %s241
          %s243 = sand.u32 %s53, 1
          %s244 = smul.addr %s243, 4
          %s245 = scalar_lea.vmem [#allocation5], %s244
          %246 = dma.done %s242, 64
        $region40: #{tpu_custom_call.1} parent=35 // pred_fallthru
          _
      $region36: #{tpu_custom_call.1} parent=5 // pred_fallthru
        _
    $region6: #{tpu_custom_call.1} parent=1 // loop_footer
      %s17 = sadd.s32 1, %s13
    $region7: #{tpu_custom_call.1} parent=1 // loop_footer_branch
      %12 = sbr.rel target = $region3
    $region8: #{tpu_custom_call.1} parent=1 // loop_exit
      _
    %247 = vsyncpa [#allocation3], 1
    %s248 = scalar_lea.sflag [#allocation3], 1
    %249 = vsyncpa %s248, 1
    %250 = vsyncpa [#allocation4], 1
    %s251 = scalar_lea.sflag [#allocation4], 1
    %252 = vsyncpa %s251, 1

</llo_original>
